<compile_context>
chip_gen: v5e
topology: v5e:2x2
jax: 0.10.0
libtpu: 0.0.40
codegen_flags: <defaults>
</compile_context>

<pallas_src>
import functools

import jax
import jax.numpy as jnp
from jax.experimental import pallas as pl
from jax.experimental.pallas import tpu as pltpu


def _se_block_kernel(x_ref, w1t_ref, w2t_ref, o_ref, *, hw_true):
    # x_ref: (TB, C, HWp)  w1t_ref: (C, Cr)  w2t_ref: (Cr, C)  o_ref: (TB, C, HWp)
    x = x_ref[...].astype(jnp.float32)                       # (TB, C, HWp)

    # --- squeeze: global average pool over spatial (lane-axis reduce).
    # Any spatial padding is zeros, so dividing by the true H*W is unbiased.
    y = jnp.sum(x, axis=-1) * jnp.float32(1.0 / hw_true)     # (TB, C)

    # --- excitation: two bias-free FCs, batched row-vector (lane-dense) form.
    h = jnp.maximum(
        jnp.dot(y, w1t_ref[...], preferred_element_type=jnp.float32), 0.0)   # (TB, Cr)
    s = jax.nn.sigmoid(
        jnp.dot(h, w2t_ref[...], preferred_element_type=jnp.float32))        # (TB, C)

    # --- channel-wise rescale: single fused multiply + unmasked lane-dense store.
    o_ref[...] = (x * s[:, :, None]).astype(o_ref.dtype)


def _choose_batch_tile(batch, bytes_per_sample, target_block_bytes=2 << 20):
    """Largest divisor of `batch` whose input block stays near ~2 MiB.

    2 MiB per block -> (in + out) x double-buffer ~= 8 MiB of VMEM, safely
    inside the default scoped VMEM of v5e/v6e/v7x while being large enough to
    amortize per-grid-step overhead against HBM bandwidth.
    """
    cap = max(1, target_block_bytes // max(1, bytes_per_sample))
    tb = 1
    for d in range(1, batch + 1):
        if batch % d == 0 and d <= cap:
            tb = d
    return tb


@functools.partial(jax.jit, donate_argnums=(0,))
def se_block(x, w1, w2):
    """SEBlock forward.

    x : (B, C, H, W)          -- donated; output aliases its HBM buffer
    w1: (C // reduction, C)   -- first nn.Linear weight (PyTorch layout)
    w2: (C, C // reduction)   -- second nn.Linear weight (PyTorch layout)
    """
    B, C, H, W = x.shape
    Cr = w1.shape[0]
    HW = H * W
    HWp = ((HW + 127) // 128) * 128          # lane-dense spatial width

    xf = x.reshape(B, C, HW)                 # free, layout-preserving reshape
    if HWp != HW:
        xf = jnp.pad(xf, ((0, 0), (0, 0), (0, HWp - HW)))

    itemsize = jnp.dtype(x.dtype).itemsize
    TB = _choose_batch_tile(B, C * HWp * itemsize)
    grid = (B // TB,)

    # Transpose weights once, outside the kernel (no in-kernel relayouts).
    w1t = w1.T                               # (C, Cr)
    w2t = w2.T                               # (Cr, C)

    cost = pl.CostEstimate(
        flops=2 * B * C * HW + 4 * B * C * Cr,          # pool sum + rescale + 2 FCs
        transcendentals=B * C,                          # sigmoid
        bytes_accessed=2 * B * C * HWp * itemsize + 2 * C * Cr * itemsize,
    )

    kernel = functools.partial(_se_block_kernel, hw_true=float(HW))

    out = pl.pallas_call(
        kernel,
        out_shape=jax.ShapeDtypeStruct((B, C, HWp), x.dtype),
        grid=grid,
        in_specs=[
            pl.BlockSpec((TB, C, HWp), lambda b: (b, 0, 0)),
            pl.BlockSpec((C, Cr), lambda b: (0, 0)),
            pl.BlockSpec((Cr, C), lambda b: (0, 0)),
        ],
        out_specs=pl.BlockSpec((TB, C, HWp), lambda b: (b, 0, 0)),
        input_output_aliases={0: 0},         # output reuses x's HBM buffer
        cost_estimate=cost,
        compiler_params=pltpu.CompilerParams(
            dimension_semantics=("parallel",)),
    )(xf, w1t, w2t)

    if HWp != HW:
        out = out[:, :, :HW]
    return out.reshape(B, C, H, W)


def se_block_ref(x, w1, w2):
    """Pure-JAX reference (matches the PyTorch SEBlock forward)."""
    y = jnp.mean(x, axis=(2, 3))                       # (B, C)
    h = jnp.maximum(y @ w1.T, 0.0)                     # (B, Cr)
    s = jax.nn.sigmoid(h @ w2.T)                       # (B, C)
    return x * s[:, :, None, None]


if __name__ == "__main__":
    key = jax.random.PRNGKey(0)
    # channel must be >= reduction for int(channel/reduction) > 0; use C=24, r=6.
    B, C, H, W = 2, 24, 16, 16
    reduction = 6
    Cr = int(C / reduction)

    kx, k1, k2 = jax.random.split(key, 3)
    x = jax.random.normal(kx, (B, C, H, W), dtype=jnp.float32)
    w1 = jax.random.normal(k1, (Cr, C), dtype=jnp.float32) * 0.3
    w2 = jax.random.normal(k2, (C, Cr), dtype=jnp.float32) * 0.3

    # Reference must be computed BEFORE the kernel call: x is donated to it.
    ref = se_block_ref(x, w1, w2)

    out = se_block(x, w1, w2)
    out = jax.block_until_ready(out)

    assert out.shape == (B, C, H, W)
    assert jnp.allclose(out, ref, atol=1e-5, rtol=1e-5)

    print("KERNEL_OK")
</pallas_src>

<mosaic_0001>
module attributes {stable_mosaic.version = 11 : i64} {
  func.func @_se_block_kernel(%arg0: i32, %arg1: memref<2x24x256xf32, #tpu.memory_space<vmem>>, %arg2: memref<24x4xf32, #tpu.memory_space<vmem>>, %arg3: memref<4x24xf32, #tpu.memory_space<vmem>>, %arg4: memref<2x24x256xf32, #tpu.memory_space<vmem>>) attributes {dimension_semantics = [#tpu.dimension_semantics<parallel>], iteration_bounds = array<i64: 1>, scalar_prefetch = 0 : i64, scratch_operands = 0 : i64, tpu.core_type = #tpu.core_type<tc>, window_params = [{transform_indices = @transform_0, window_bounds = array<i64: 2, 24, 256>}, {pipeline_mode = #tpu.pipeline_mode<synchronous>, transform_indices = @transform_1, window_bounds = array<i64: 24, 4>}, {pipeline_mode = #tpu.pipeline_mode<synchronous>, transform_indices = @transform_2, window_bounds = array<i64: 4, 24>}, {transform_indices = @transform_3, window_bounds = array<i64: 2, 24, 256>}]} {
    %c0 = arith.constant 0 : index
    %c0_0 = arith.constant 0 : index
    %c0_1 = arith.constant 0 : index
    %0 = vector.load %arg1[%c0, %c0_0, %c0_1] : memref<2x24x256xf32, #tpu.memory_space<vmem>>, vector<2x24x256xf32>
    %cst = arith.constant dense<0.000000e+00> : vector<2x24xf32>
    %1 = vector.multi_reduction <add>, %0, %cst [2] : vector<2x24x256xf32> to vector<2x24xf32>
    %cst_2 = arith.constant 3.906250e-03 : f32
    %2 = vector.broadcast %cst_2 : f32 to vector<2x24xf32>
    %3 = arith.mulf %1, %2 : vector<2x24xf32>
    %c0_3 = arith.constant 0 : index
    %c0_4 = arith.constant 0 : index
    %4 = vector.load %arg2[%c0_3, %c0_4] : memref<24x4xf32, #tpu.memory_space<vmem>>, vector<24x4xf32>
    %cst_5 = arith.constant dense<0.000000e+00> : vector<2x4xf32>
    %5 = tpu.matmul %3, %4, %cst_5 {dimension_numbers = #tpu.dot_dimension_numbers<[1], [0], [0], [1], [0, 0, 1, 1], [], []>} : vector<2x24xf32>, vector<24x4xf32>, vector<2x4xf32> -> vector<2x4xf32>
    %cst_6 = arith.constant 0.000000e+00 : f32
    %6 = vector.broadcast %cst_6 : f32 to vector<2x4xf32>
    %7 = arith.maximumf %5, %6 : vector<2x4xf32>
    %c0_7 = arith.constant 0 : index
    %c0_8 = arith.constant 0 : index
    %8 = vector.load %arg3[%c0_7, %c0_8] : memref<4x24xf32, #tpu.memory_space<vmem>>, vector<4x24xf32>
    %cst_9 = arith.constant dense<0.000000e+00> : vector<2x24xf32>
    %9 = tpu.matmul %7, %8, %cst_9 {dimension_numbers = #tpu.dot_dimension_numbers<[1], [0], [0], [1], [0, 0, 1, 1], [], []>} : vector<2x4xf32>, vector<4x24xf32>, vector<2x24xf32> -> vector<2x24xf32>
    %10 = arith.negf %9 : vector<2x24xf32>
    %11 = math.exp %10 : vector<2x24xf32>
    %cst_10 = arith.constant 1.000000e+00 : f32
    %12 = vector.broadcast %cst_10 : f32 to vector<2x24xf32>
    %13 = arith.addf %12, %11 : vector<2x24xf32>
    %14 = arith.divf %12, %13 : vector<2x24xf32>
    %15 = vector.shape_cast %14 : vector<2x24xf32> to vector<2x24x1xf32>
    %16 = vector.broadcast %15 : vector<2x24x1xf32> to vector<2x24x256xf32>
    %17 = arith.mulf %0, %16 : vector<2x24x256xf32>
    %c0_11 = arith.constant 0 : index
    %c0_12 = arith.constant 0 : index
    %c0_13 = arith.constant 0 : index
    %18 = vector.load %arg4[%c0_11, %c0_12, %c0_13] : memref<2x24x256xf32, #tpu.memory_space<vmem>>, vector<2x24x256xf32>
    tpu.vector_store %arg4[%c0_11, %c0_12, %c0_13], %17 {strides = array<i32>} : memref<2x24x256xf32, #tpu.memory_space<vmem>>, vector<2x24x256xf32>,
    return
  }
  func.func @transform_0(%arg0: i32) -> (i32, i32, i32) {
    %c0_i32 = arith.constant 0 : i32
    %c0_i32_0 = arith.constant 0 : i32
    %c0_i32_1 = arith.constant 0 : i32
    return %arg0, %c0_i32, %c0_i32_0 : i32, i32, i32
  }
  func.func @transform_1(%arg0: i32) -> (i32, i32) {
    %c0_i32 = arith.constant 0 : i32
    %c0_i32_0 = arith.constant 0 : i32
    %c0_i32_1 = arith.constant 0 : i32
    return %c0_i32, %c0_i32_0 : i32, i32
  }
  func.func @transform_2(%arg0: i32) -> (i32, i32) {
    %c0_i32 = arith.constant 0 : i32
    %c0_i32_0 = arith.constant 0 : i32
    %c0_i32_1 = arith.constant 0 : i32
    return %c0_i32, %c0_i32_0 : i32, i32
  }
  func.func @transform_3(%arg0: i32) -> (i32, i32, i32) {
    %c0_i32 = arith.constant 0 : i32
    %c0_i32_0 = arith.constant 0 : i32
    %c0_i32_1 = arith.constant 0 : i32
    return %arg0, %c0_i32, %c0_i32_0 : i32, i32, i32
  }
}

</mosaic_0001>

<llo_original>
// kernel: se_block.1
$region0: #{se_block.1}
  #allocation0 [shape = 'u32[]', space=smem, size = 0x4, offset = 0x4, fixed_abs, tag = 'smem constant byte address 0x4 - core index']
  #allocation1 [shape = 'u32[72,128]{1,0:T(1,128)}', space=vmem, size = 0x9000, scoped, tag = 'internal scratch']
  %s0 = inlined_call_operand.vmem [shape: f32[2,24,256], index: 0, kind: input, shape index: {}, may-alias: {0,3}]
  %s1 = inlined_call_operand.vmem [shape: f32[24,4], index: 1, kind: input, shape index: {}]
  %s2 = inlined_call_operand.vmem [shape: f32[4,24], index: 2, kind: input, shape index: {}]
  %s3 = inlined_call_operand.vmem [shape: f32[2,24,256], index: 3, kind: output, shape index: {}, may-alias: {0,3}]
  %s4 = sld [smem:[#allocation0]]
  $region22: #{se_block.1} parent=0
    _
  %s6 = ssub.s32 1, %s4
  %s7 = scalar_select 0, %s6, %s4
  // Predicated region
  $region2: #{se_block.1} parent=0 // pred_check
    _
  $region3: #{se_block.1} parent=0 // pred_check_branch
    %9 = sbr.rel (0) target = $region5
  $region4: #{se_block.1} parent=0 // pred_region
    _
  $region5: #{se_block.1} parent=0 // pred_fallthru
    _
  // Predicated region
  $region6: #{se_block.1} parent=0 // pred_check
    _
  $region7: #{se_block.1} parent=0 // pred_check_branch
    %11 = sbr.rel (0) target = $region9
  $region8: #{se_block.1} parent=0 // pred_region
    _
  $region9: #{se_block.1} parent=0 // pred_fallthru
    _
  // Predicated region
  $region10: #{se_block.1} parent=0 // pred_check
    _
  $region11: #{se_block.1} parent=0 // pred_check_branch
    %13 = sbr.rel (0) target = $region13
  $region12: #{se_block.1} parent=0 // pred_region
    _
  $region13: #{se_block.1} parent=0 // pred_fallthru
    _
  %v14 = vld [vmem:[%s0] sm:$0xff]
  %v15 = vld [vmem:[%s0 + $0x8] sm:$0xff]
  %v16 = vld [vmem:[%s0 + $0x10] sm:$0xff]
  %v17 = vld [vmem:[%s0 + $0x18] sm:$0xff]
  %v18 = vld [vmem:[%s0 + $0x20] sm:$0xff]
  %v19 = vld [vmem:[%s0 + $0x28] sm:$0xff]
  %v20 = vld [vmem:[%s0 + $0x30] sm:$0xff]
  %v21 = vld [vmem:[%s0 + $0x38] sm:$0xff]
  %v22 = vld [vmem:[%s0 + $0x40] sm:$0xff]
  %v23 = vld [vmem:[%s0 + $0x48] sm:$0xff]
  %v24 = vld [vmem:[%s0 + $0x50] sm:$0xff]
  %v25 = vld [vmem:[%s0 + $0x58] sm:$0xff]
  %v26 = vadd.f32 %v14, %v15
  %27 = vadd.xlane.f32.xlu0 %v26
  %v28 = vpop.xlane.xlu0 %27
  %v29 = vadd.f32 %v16, %v17
  %30 = vadd.xlane.f32.xlu0 %v29
  %v31 = vpop.xlane.xlu0 %30
  %v32 = vadd.f32 %v18, %v19
  %33 = vadd.xlane.f32.xlu0 %v32
  %v34 = vpop.xlane.xlu0 %33
  %v35 = vadd.f32 %v20, %v21
  %36 = vadd.xlane.f32.xlu0 %v35
  %v37 = vpop.xlane.xlu0 %36
  %v38 = vadd.f32 %v22, %v23
  %39 = vadd.xlane.f32.xlu0 %v38
  %v40 = vpop.xlane.xlu0 %39
  %v41 = vadd.f32 %v24, %v25
  %42 = vadd.xlane.f32.xlu0 %v41
  %v43 = vpop.xlane.xlu0 %42
  %v44 = vmul.f32 %v28, 0.00390625
  %v45 = vmul.f32 %v31, 0.00390625
  %v46 = vmul.f32 %v34, 0.00390625
  %v47 = vmul.f32 %v37, 0.00390625
  %v48 = vmul.f32 %v40, 0.00390625
  %v49 = vmul.f32 %v43, 0.00390625
  %v50 = vld [vmem:[%s1] sm:$0xff]
  %v51 = vld [vmem:[%s1 + $0x8] sm:$0xff]
  %v52 = vld [vmem:[%s1 + $0x10] sm:$0xff]
  %v59 = vlaneseq
  %v60 = vand.u32 %v59, 127
  %v61 = vperm.slane %v44, %v60
  %v62 = vadd.s32 %v60, 4294967288
  %v63 = vperm.slane %v45, %v62
  %vm64 = vcmask 130112
  %v65 = vsel %vm64, %v63, %v61
  %v66 = vadd.s32 %v60, 4294967280
  %v67 = vperm.slane %v46, %v66
  %vm68 = vcmask 195712
  %v69 = vsel %vm68, %v67, %v65
  %v70 = vperm.slane %v47, %v60
  %v71 = vperm.slane %v48, %v62
  %v72 = vsel %vm64, %v71, %v70
  %v73 = vperm.slane %v49, %v66
  %v74 = vsel %vm68, %v73, %v72
  %vm75 = vcmask 1041409
  %v76 = vsel %vm75, %v74, %v69
  %vm77 = vcmask 195584
  %v78 = vsel %vm77, %v76, 0
  %80 = vmatpush.msra.mxu0 0.0
  %81 = vmatpush.msra.mxu0 0.0
  %82 = vmatpush.msra.mxu0 0.0
  %83 = vmatpush.msra.mxu0 0.0
  %84 = vmatpush.msra.mxu0 0.0
  %85 = vmatpush.msra.mxu0 0.0
  %86 = vmatpush.msra.mxu0 0.0
  %87 = vmatpush.msra.mxu0 0.0
  %88 = vmatpush.msra.mxu0 0.0
  %89 = vmatpush.msra.mxu0 0.0
  %90 = vmatpush.msra.mxu0 0.0
  %91 = vmatpush.msra.mxu0 0.0
  %92 = vmatpush.msra.mxu0 0.0
  %93 = vmatpush.msra.mxu0 %v52
  %94 = vmatpush.msra.mxu0 %v51
  %95 = vmatpush.msra.mxu0 %v50
  %96 = vmatmul.f32.gmra.mxu0 %v78
  %v97 = vpop.f32.mrf.mxu0
  %v98 = vadd.f32 0.0, %v97
  %99 = vdwg.mxu0
  %v100 = vmax.f32 %v98, 0.0
  %v101 = vld [vmem:[%s2] sm:$0xf]
  %vm102 = vcmask 31744
  %v104 = vsel %vm102, %v100, 0
  %vm106 = vcmask 1043456
  %v108 = vsel %vm106, %v101, 0
  %110 = vmatpush.msra.mxu0 0.0
  %111 = vmatpush.msra.mxu0 0.0
  %112 = vmatpush.msra.mxu0 0.0
  %113 = vmatpush.msra.mxu0 0.0
  %114 = vmatpush.msra.mxu0 0.0
  %115 = vmatpush.msra.mxu0 0.0
  %116 = vmatpush.msra.mxu0 0.0
  %117 = vmatpush.msra.mxu0 0.0
  %118 = vmatpush.msra.mxu0 0.0
  %119 = vmatpush.msra.mxu0 0.0
  %120 = vmatpush.msra.mxu0 0.0
  %121 = vmatpush.msra.mxu0 0.0
  %122 = vmatpush.msra.mxu0 0.0
  %123 = vmatpush.msra.mxu0 0.0
  %124 = vmatpush.msra.mxu0 0.0
  %125 = vmatpush.msra.mxu0 %v108
  %126 = vmatmul.f32.gmra.mxu0 %v104
  %v127 = vpop.f32.mrf.mxu0
  %v128 = vadd.f32 0.0, %v127
  %129 = vdwg.mxu0
  %v130 = vxor.u32 %v128, 2147483648
  %v131 = vmul.f32 %v130, 1.442695
  %v132 = vpow.pop %v131
  %v133 = vadd.f32 %v132, 1.0
  %v134 = vrcp.pop %v133
  %v135 = vmul.f32 %v133, %v134
  %v136 = vsub.f32 1.0, %v135
  %v137 = vmul.f32 %v134, %v136
  %v138 = vadd.f32 %v134, %v137
  %vm139 = vweird.f32 %v133
  %vm140 = vweird.f32 %v134
  %vm141 = vmor %vm139, %vm140
  %v142 = vsel %vm141, %v134, %v138
  %v143 = vand.u32 2147483647, %v133
  %vm144 = vcmp.eq.f32.partialorder %v143, 8.507059e+37
  %v145 = vand.u32 %v133, 2147483648
  %v146 = vor.u32 1.1754944e-38, %v145
  %v147 = vsel %vm144, %v146, %v142
  %v148 = vmul.f32 1.0, %v147
  %v149 = vperm.slane %v148, 0
  %v150 = vlaneseq
  %v151 = vshrl.u32 %v150, 7
  %153 = vset.pattern.permute.xlu0 %v151
  %154 = vperm.xlu0 %153, %v149
  %v155 = vpop.permute.xlu0 %154
  %v156 = vlaneseq
  %v157 = vshrl.u32 %v156, 7
  %v158 = vadd.s32 %v157, 8
  %159 = vset.pattern.permute.xlu0 %v158
  %160 = vperm.xlu0 %159, %v149
  %v161 = vpop.permute.xlu0 %160
  %v162 = vlaneseq
  %v163 = vshrl.u32 %v162, 7
  %v164 = vadd.s32 %v163, 16
  %165 = vset.pattern.permute.xlu0 %v164
  %166 = vperm.xlu0 %165, %v149
  %v167 = vpop.permute.xlu0 %166
  %v168 = vperm.slane %v148, 1
  %v169 = vlaneseq
  %v170 = vshrl.u32 %v169, 7
  %172 = vset.pattern.permute.xlu0 %v170
  %173 = vperm.xlu0 %172, %v168
  %v174 = vpop.permute.xlu0 %173
  %v175 = vlaneseq
  %v176 = vshrl.u32 %v175, 7
  %v177 = vadd.s32 %v176, 8
  %178 = vset.pattern.permute.xlu0 %v177
  %179 = vperm.xlu0 %178, %v168
  %v180 = vpop.permute.xlu0 %179
  %v181 = vlaneseq
  %v182 = vshrl.u32 %v181, 7
  %v183 = vadd.s32 %v182, 16
  %184 = vset.pattern.permute.xlu0 %v183
  %185 = vperm.xlu0 %184, %v168
  %v186 = vpop.permute.xlu0 %185
  %v187 = vmul.f32 %v14, %v155
  %v188 = vmul.f32 %v15, %v155
  %v189 = vmul.f32 %v16, %v161
  %v190 = vmul.f32 %v17, %v161
  %v191 = vmul.f32 %v18, %v167
  %v192 = vmul.f32 %v19, %v167
  %v193 = vmul.f32 %v20, %v174
  %v194 = vmul.f32 %v21, %v174
  %v195 = vmul.f32 %v22, %v180
  %v196 = vmul.f32 %v23, %v180
  %v197 = vmul.f32 %v24, %v186
  %v198 = vmul.f32 %v25, %v186
  %199 = vst [vmem:[%s3] sm:$0xff] %v187
  %200 = vst [vmem:[%s3 + $0x8] sm:$0xff] %v188
  %201 = vst [vmem:[%s3 + $0x10] sm:$0xff] %v189
  %202 = vst [vmem:[%s3 + $0x18] sm:$0xff] %v190
  %203 = vst [vmem:[%s3 + $0x20] sm:$0xff] %v191
  %204 = vst [vmem:[%s3 + $0x28] sm:$0xff] %v192
  %205 = vst [vmem:[%s3 + $0x30] sm:$0xff] %v193
  %206 = vst [vmem:[%s3 + $0x38] sm:$0xff] %v194
  %207 = vst [vmem:[%s3 + $0x40] sm:$0xff] %v195
  %208 = vst [vmem:[%s3 + $0x48] sm:$0xff] %v196
  %209 = vst [vmem:[%s3 + $0x50] sm:$0xff] %v197
  %210 = vst [vmem:[%s3 + $0x58] sm:$0xff] %v198
  // Predicated region
  $region14: #{se_block.1} parent=0 // pred_check
    _
  $region15: #{se_block.1} parent=0 // pred_check_branch
    %212 = sbr.rel (0) target = $region17
  $region16: #{se_block.1} parent=0 // pred_region
    _
  $region17: #{se_block.1} parent=0 // pred_fallthru
    _
  // Predicated region
  $region18: #{se_block.1} parent=0 // pred_check
    _
  $region19: #{se_block.1} parent=0 // pred_check_branch
    %214 = sbr.rel (0) target = $region21
  $region20: #{se_block.1} parent=0 // pred_region
    _
  $region21: #{se_block.1} parent=0 // pred_fallthru
    _

</llo_original>
